<compile_context>
chip_gen: v7x
topology: tpu7x:2x2x1
jax: 0.10.0
libtpu: 0.0.40
codegen_flags: <defaults>
</compile_context>

<pallas_src>
import jax
import jax.numpy as jnp
from jax.experimental import pallas as pl
from jax.experimental.pallas import tpu as pltpu

_LANE = 128
_MAX_COLS = 2048  # lane-dense width cap; keeps row budget comfortably >= sublane


def _identity_kernel(x_ref, o_ref):
    # Pure copy: load the VMEM tile and store it back unchanged.
    o_ref[...] = x_ref[...]


def _chip_kind() -> str:
    try:
        return jax.devices()[0].device_kind.lower()
    except Exception:
        return ""


def _target_tile_bytes(kind: str) -> int:
    # v5e: 16 MiB default scoped VMEM -> 2 MiB tiles (8 MiB live, in+out double
    # buffered).  v6e/v7x: 32 MiB scoped default -> 4 MiB tiles (16 MiB live),
    # fewer grid steps, still well inside v7x's 64 MiB physical VMEM.
    if "v5" in kind:
        return 2 * 1024 * 1024
    if "v6" in kind or "v7" in kind:
        return 4 * 1024 * 1024
    return 2 * 1024 * 1024  # conservative default for unknown chips


def _pick_tiling(total, itemsize, sub, kind):
    """Return (rows, cols, tile_rows, num_steps) for an exact, unpadded tiling,
    or None if the element count cannot be tiled without padding."""
    tile_bytes = _target_tile_bytes(kind)

    # Widest lane-dense column count (multiple of 128) that divides `total`
    # and leaves a sublane-aligned row count -> every store is a full-width vst.
    cols = None
    c = (min(_MAX_COLS, total) // _LANE) * _LANE
    while c >= _LANE:
        if total % c == 0 and (total // c) % sub == 0:
            cols = c
            break
        c -= _LANE
    if cols is None:
        return None
    rows = total // cols

    # Largest divisor of `rows` that is a multiple of `sub` and fits the
    # per-generation tile budget -> no partial (masked) blocks, no padding.
    budget_rows = max(sub, (tile_bytes // (cols * itemsize)) // sub * sub)
    tile_rows = None
    d = (min(rows, budget_rows) // sub) * sub
    while d >= sub:
        if rows % d == 0:
            tile_rows = d
            break
        d -= sub
    if tile_rows is None:
        return None
    num_steps = rows // tile_rows

    # v7x only: two TensorCores share the "parallel" axis.  For copies large
    # enough to amortize per-step DMA setup, prefer an even step count so both
    # cores get equal row ranges (an odd count leaves one TC idle at the end).
    if "v7" in kind and total * itemsize >= 4 * 1024 * 1024 and num_steps % 2 == 1:
        d = tile_rows if num_steps > 1 else max(sub, (tile_rows // 2 // sub) * sub)
        d = (min(d, budget_rows) // sub) * sub
        while d >= sub:
            if rows % d == 0 and (rows // d) % 2 == 0:
                tile_rows = d
                num_steps = rows // d
                break
            d -= sub

    return rows, cols, tile_rows, num_steps


@jax.jit
def _identity_copy_pallas(x: jax.Array) -> jax.Array:
    """Explicit Pallas memcpy Identity (pattern demo / fresh-buffer variant)."""
    orig_shape = x.shape
    dtype = x.dtype
    total = x.size
    itemsize = jnp.dtype(dtype).itemsize

    # Nothing to copy, or a dtype TPU does not tile natively (int64/float64):
    # Identity is a no-op, just hand the input back.
    if total == 0 or itemsize not in (1, 2, 4):
        return x

    sub = max(8, 32 // itemsize)  # min sublane count: f32->8, bf16->16, int8->32
    kind = _chip_kind()
    tiling = _pick_tiling(total, itemsize, sub, kind)
    if tiling is None:
        # Awkward size: do NOT pad->copy->slice (3x HBM traffic); Identity is a
        # no-op anyway.
        return x

    rows, cols, tile_rows, num_steps = tiling
    x2d = x.reshape(rows, cols)

    out2d = pl.pallas_call(
        _identity_kernel,
        out_shape=jax.ShapeDtypeStruct((rows, cols), dtype),
        grid=(num_steps,),
        in_specs=[pl.BlockSpec((tile_rows, cols), lambda i: (i, 0))],
        out_specs=pl.BlockSpec((tile_rows, cols), lambda i: (i, 0)),
        compiler_params=pltpu.CompilerParams(
            dimension_semantics=("parallel",),
        ),
        cost_estimate=pl.CostEstimate(
            flops=0,
            transcendentals=0,
            bytes_accessed=2 * total * itemsize,
        ),
    )(x2d)

    return out2d.reshape(orig_shape)


def identity_pallas(x: jax.Array, *, force_kernel: bool = False) -> jax.Array:
    """Identity forward pass: returns x unchanged (same shape, dtype, values).

    Default path is a pure pass-through (zero HBM traffic) — the optimal
    implementation of Identity.  Set force_kernel=True to run the explicit
    Pallas memcpy kernel (e.g. when a fresh output buffer is required).
    """
    if not force_kernel:
        return x
    return _identity_copy_pallas(x)


if __name__ == "__main__":
    key = jax.random.PRNGKey(0)
    # NCHW input, small shape consistent with a conv-style module.
    x = jax.random.normal(key, (2, 4, 16, 16), dtype=jnp.float32)

    # Default (optimal) path: pure pass-through.
    y_fast = identity_pallas(x)
    jax.block_until_ready(y_fast)

    # Explicit Pallas memcpy path (runs the kernel once).
    y_kernel = identity_pallas(x, force_kernel=True)
    jax.block_until_ready(y_kernel)

    for y in (y_fast, y_kernel):
        assert y.shape == x.shape, (y.shape, x.shape)
        assert y.dtype == x.dtype, (y.dtype, x.dtype)
        assert bool(jnp.all(y == x)), "Identity kernel output mismatch"

    print("KERNEL_OK")
</pallas_src>

<mosaic_0001>
module attributes {stable_mosaic.version = 11 : i64} {
  func.func @_identity_kernel(%arg0: i32, %arg1: memref<8x256xf32, #tpu.memory_space<vmem>>, %arg2: memref<8x256xf32, #tpu.memory_space<vmem>>) attributes {dimension_semantics = [#tpu.dimension_semantics<parallel>], iteration_bounds = array<i64: 1>, scalar_prefetch = 0 : i64, scratch_operands = 0 : i64, tpu.core_type = #tpu.core_type<tc>, window_params = [{transform_indices = @transform_0, window_bounds = array<i64: 8, 256>}, {transform_indices = @transform_1, window_bounds = array<i64: 8, 256>}]} {
    %c0 = arith.constant 0 : index
    %c0_0 = arith.constant 0 : index
    %0 = vector.load %arg1[%c0, %c0_0] : memref<8x256xf32, #tpu.memory_space<vmem>>, vector<8x256xf32>
    %c0_1 = arith.constant 0 : index
    %c0_2 = arith.constant 0 : index
    %1 = vector.load %arg2[%c0_1, %c0_2] : memref<8x256xf32, #tpu.memory_space<vmem>>, vector<8x256xf32>
    tpu.vector_store %arg2[%c0_1, %c0_2], %0 {strides = array<i32>} : memref<8x256xf32, #tpu.memory_space<vmem>>, vector<8x256xf32>,
    return
  }
  func.func @transform_0(%arg0: i32) -> (i32, i32) {
    %c0_i32 = arith.constant 0 : i32
    %c0_i32_0 = arith.constant 0 : i32
    return %arg0, %c0_i32 : i32, i32
  }
  func.func @transform_1(%arg0: i32) -> (i32, i32) {
    %c0_i32 = arith.constant 0 : i32
    %c0_i32_0 = arith.constant 0 : i32
    return %arg0, %c0_i32 : i32, i32
  }
}

</mosaic_0001>

<llo_original>
// kernel: _identity_copy_pallas.1
$region0: #{_identity_copy_pallas.1}
  #allocation0 [shape = 'u32[]', space=smem, size = 0x4, offset = 0x4, fixed_abs, tag = 'smem constant byte address 0x4 - core index']
  #allocation1 [shape = 'u32[144,128]{1,0:T(1,128)}', space=vmem, size = 0x12000, scoped, tag = 'internal scratch']
  %s0 = inlined_call_operand.vmem [shape: f32[8,256], index: 0, kind: input, shape index: {}]
  %s1 = inlined_call_operand.vmem [shape: f32[8,256], index: 1, kind: output, shape index: {}]
  %s2 = sld [smem:[#allocation0]]
  $region14: #{_identity_copy_pallas.1} parent=0
    _
  %s4 = ssub.s32 1, %s2
  %s5 = scalar_select 0, %s4, %s2
  // Predicated region
  $region2: #{_identity_copy_pallas.1} parent=0 // pred_check
    _
  $region3: #{_identity_copy_pallas.1} parent=0 // pred_check_branch
    %7 = sbr.rel (0) target = $region5
  $region4: #{_identity_copy_pallas.1} parent=0 // pred_region
    _
  $region5: #{_identity_copy_pallas.1} parent=0 // pred_fallthru
    _
  %v8 = vld [vmem:[%s0] sm:$0xff]
  %v9 = vld [vmem:[%s0 + $0x8] sm:$0xff]
  %10 = vst [vmem:[%s1] sm:$0xff] %v8
  %11 = vst [vmem:[%s1 + $0x8] sm:$0xff] %v9
  // Predicated region
  $region6: #{_identity_copy_pallas.1} parent=0 // pred_check
    _
  $region7: #{_identity_copy_pallas.1} parent=0 // pred_check_branch
    %13 = sbr.rel (0) target = $region9
  $region8: #{_identity_copy_pallas.1} parent=0 // pred_region
    _
  $region9: #{_identity_copy_pallas.1} parent=0 // pred_fallthru
    _
  // Predicated region
  $region10: #{_identity_copy_pallas.1} parent=0 // pred_check
    _
  $region11: #{_identity_copy_pallas.1} parent=0 // pred_check_branch
    %15 = sbr.rel (0) target = $region13
  $region12: #{_identity_copy_pallas.1} parent=0 // pred_region
    _
  $region13: #{_identity_copy_pallas.1} parent=0 // pred_fallthru
    _

</llo_original>
